<compile_context>
chip_gen: v7x
topology: tpu7x:2x2x1
jax: 0.10.0
libtpu: 0.0.40
codegen_flags: <defaults>
</compile_context>

<pallas_src>
import functools

import jax
import jax.numpy as jnp
from jax import lax
from jax.experimental import pallas as pl
from jax.experimental.pallas import tpu as pltpu


def _round_up(n: int, m: int) -> int:
    return ((n + m - 1) // m) * m


def policy3fc_kernel(x_ref, w1_ref, b1_ref, w2_ref, b2_ref, w3_ref, b3_ref, o_ref,
                     *, row_chunk):
    """One batch tile: loop over row chunks, 3 fused matmuls per chunk."""
    n_chunks = x_ref.shape[0] // row_chunk

    def chunk_body(c, carry):
        r = pl.multiple_of(c * row_chunk, row_chunk)
        xc = x_ref[pl.ds(r, row_chunk), :]
        # fc1 + relu  (bf16 operands, f32 MXU accumulation)
        h1 = jnp.dot(xc, w1_ref[...], preferred_element_type=jnp.float32)
        h1 = jnp.maximum(h1 + b1_ref[...], 0.0).astype(jnp.bfloat16)
        # fc2 + relu
        h2 = jnp.dot(h1, w2_ref[...], preferred_element_type=jnp.float32)
        h2 = jnp.maximum(h2 + b2_ref[...], 0.0).astype(jnp.bfloat16)
        # fc3 (logits, no activation) — lane-dense padded output, bf16 writeback
        out = jnp.dot(h2, w3_ref[...], preferred_element_type=jnp.float32)
        o_ref[pl.ds(r, row_chunk), :] = (out + b3_ref[...]).astype(o_ref.dtype)
        return carry

    lax.fori_loop(0, n_chunks, chunk_body, 0, unroll=True)


@functools.partial(jax.jit, static_argnames=("block_b",))
def policy3fc_forward(x, w1, b1, w2, b2, w3, b3, *, block_b=1024):
    B, din = x.shape
    hid1 = w1.shape[1]
    hid2 = w2.shape[1]
    act = w3.shape[1]

    # Pad hidden2 / action_space up to a multiple of 128 lanes (numerically exact).
    h2p = _round_up(hid2, 128)
    ap = _round_up(act, 128)

    # bf16 operands for native MXU rate; biases stay f32.
    xb = x.astype(jnp.bfloat16)
    w1b = w1.astype(jnp.bfloat16)
    w2b = jnp.pad(w2, ((0, 0), (0, h2p - hid2))).astype(jnp.bfloat16)
    b2p = jnp.pad(b2, ((0, 0), (0, h2p - hid2)))
    w3b = jnp.pad(w3, ((0, h2p - hid2), (0, ap - act))).astype(jnp.bfloat16)
    b3p = jnp.pad(b3, ((0, 0), (0, ap - act)))

    # --- batch tiling --------------------------------------------------------
    # Large tiles amortize per-grid-step overhead; always >= 2 grid steps so
    # both v7x TensorCores get work; sizes are multiples of 16 (bf16 sublanes).
    block_b = max(64, (block_b // 64) * 64)
    half = -(-B // 2)                                   # cdiv(B, 2)
    if half >= 64:
        tb = min(block_b, _round_up(half, 64))
        row_chunk = 64
    else:
        tb = max(16, _round_up(half, 16))
        row_chunk = tb
    n_steps = max(2, -(-B // tb))
    bp = n_steps * tb
    if bp != B:
        xb = jnp.pad(xb, ((0, bp - B), (0, 0)))

    flops = 2 * bp * (din * hid1 + hid1 * h2p + h2p * ap)
    bytes_accessed = (
        xb.size * 2 + w1b.size * 2 + w2b.size * 2 + w3b.size * 2
        + b1.size * 4 + b2p.size * 4 + b3p.size * 4 + bp * ap * 2
    )

    kernel = functools.partial(policy3fc_kernel, row_chunk=row_chunk)

    out = pl.pallas_call(
        kernel,
        out_shape=jax.ShapeDtypeStruct((bp, ap), jnp.bfloat16),
        grid=(n_steps,),
        in_specs=[
            pl.BlockSpec((tb, din), lambda i: (i, 0)),    # x: tiled over batch
            pl.BlockSpec((din, hid1), lambda i: (0, 0)),  # W1: VMEM-resident
            pl.BlockSpec((1, hid1), lambda i: (0, 0)),    # b1: resident
            pl.BlockSpec((hid1, h2p), lambda i: (0, 0)),  # W2: resident
            pl.BlockSpec((1, h2p), lambda i: (0, 0)),     # b2: resident
            pl.BlockSpec((h2p, ap), lambda i: (0, 0)),    # W3: resident
            pl.BlockSpec((1, ap), lambda i: (0, 0)),      # b3: resident
        ],
        out_specs=pl.BlockSpec((tb, ap), lambda i: (i, 0)),
        compiler_params=pltpu.CompilerParams(
            dimension_semantics=("parallel",),
            vmem_limit_bytes=32 * 1024 * 1024,
        ),
        cost_estimate=pl.CostEstimate(
            flops=flops, transcendentals=0, bytes_accessed=bytes_accessed
        ),
    )(xb, w1b, b1, w2b, b2p, w3b, b3p)

    # Strip batch padding and lane padding; return f32 logits like the torch model.
    return out[:B, :act].astype(jnp.float32)


def xavier_normal(key, fan_in, fan_out, dtype=jnp.float32):
    # torch.nn.init.xavier_normal_: std = sqrt(2 / (fan_in + fan_out))
    std = jnp.sqrt(2.0 / (fan_in + fan_out))
    # Returned in [in, out] layout (kernel-ready; transpose of torch's [out, in]).
    return std * jax.random.normal(key, (fan_in, fan_out), dtype=dtype)


if __name__ == "__main__":
    # Small, module-consistent shapes.
    batch = 2
    input_dimension = 16          # -> fc1 input = input_dimension * 2 = 32
    in_features = input_dimension * 2
    hidden1 = 512
    hidden2 = 64
    action_space = 8

    key = jax.random.PRNGKey(0)
    kx, k1, k2, k3 = jax.random.split(key, 4)

    x = jax.random.normal(kx, (batch, in_features), dtype=jnp.float32)

    # Deterministic xavier-normal weights, zero biases (matches init_weights()).
    w1 = xavier_normal(k1, in_features, hidden1)
    b1 = jnp.zeros((1, hidden1), jnp.float32)
    w2 = xavier_normal(k2, hidden1, hidden2)
    b2 = jnp.zeros((1, hidden2), jnp.float32)
    w3 = xavier_normal(k3, hidden2, action_space)
    b3 = jnp.zeros((1, action_space), jnp.float32)

    out = policy3fc_forward(x, w1, b1, w2, b2, w3, b3)
    out = jax.block_until_ready(out)

    # Pure-JAX reference mirroring the kernel's bf16-operand / f32-accumulate math
    # and the final bf16 logits writeback.
    def ref(x):
        f32 = jnp.float32
        bf = jnp.bfloat16
        xr = x.astype(bf).astype(f32)
        w1r = w1.astype(bf).astype(f32)
        w2r = w2.astype(bf).astype(f32)
        w3r = w3.astype(bf).astype(f32)
        h1 = jnp.maximum(xr @ w1r + b1, 0.0).astype(bf).astype(f32)
        h2 = jnp.maximum(h1 @ w2r + b2, 0.0).astype(bf).astype(f32)
        return (h2 @ w3r + b3).astype(bf).astype(f32)

    expected = ref(x)
    assert out.shape == (batch, action_space)
    assert jnp.allclose(out, expected, atol=1e-2, rtol=1e-2), "mismatch vs reference"

    print("KERNEL_OK")
</pallas_src>

<mosaic_0001>
module attributes {stable_mosaic.version = 11 : i64} {
  func.func @policy3fc_kernel(%arg0: i32, %arg1: memref<16x32xbf16, #tpu.memory_space<vmem>>, %arg2: memref<32x512xbf16, #tpu.memory_space<vmem>>, %arg3: memref<1x512xf32, #tpu.memory_space<vmem>>, %arg4: memref<512x128xbf16, #tpu.memory_space<vmem>>, %arg5: memref<1x128xf32, #tpu.memory_space<vmem>>, %arg6: memref<128x128xbf16, #tpu.memory_space<vmem>>, %arg7: memref<1x128xf32, #tpu.memory_space<vmem>>, %arg8: memref<16x128xbf16, #tpu.memory_space<vmem>>) attributes {dimension_semantics = [#tpu.dimension_semantics<parallel>], iteration_bounds = array<i64: 2>, scalar_prefetch = 0 : i64, scratch_operands = 0 : i64, tpu.core_type = #tpu.core_type<tc>, window_params = [{transform_indices = @transform_0, window_bounds = array<i64: 16, 32>}, {pipeline_mode = #tpu.pipeline_mode<synchronous>, transform_indices = @transform_1, window_bounds = array<i64: 32, 512>}, {pipeline_mode = #tpu.pipeline_mode<synchronous>, transform_indices = @transform_2, window_bounds = array<i64: 1, 512>}, {pipeline_mode = #tpu.pipeline_mode<synchronous>, transform_indices = @transform_3, window_bounds = array<i64: 512, 128>}, {pipeline_mode = #tpu.pipeline_mode<synchronous>, transform_indices = @transform_4, window_bounds = array<i64: 1, 128>}, {pipeline_mode = #tpu.pipeline_mode<synchronous>, transform_indices = @transform_5, window_bounds = array<i64: 128, 128>}, {pipeline_mode = #tpu.pipeline_mode<synchronous>, transform_indices = @transform_6, window_bounds = array<i64: 1, 128>}, {transform_indices = @transform_7, window_bounds = array<i64: 16, 128>}]} {
    %c0_i32 = arith.constant 0 : i32
    %c16_i32 = arith.constant 16 : i32
    %0 = arith.muli %c0_i32, %c16_i32 : i32
    %1 = tpu.assume_multiple %0, 16 : i32
    %2 = arith.index_cast %1 : i32 to index
    %c0 = arith.constant 0 : index
    %3 = vector.load %arg1[%2, %c0] : memref<16x32xbf16, #tpu.memory_space<vmem>>, vector<16x32xbf16>
    %c0_0 = arith.constant 0 : index
    %c0_1 = arith.constant 0 : index
    %4 = vector.load %arg2[%c0_0, %c0_1] : memref<32x512xbf16, #tpu.memory_space<vmem>>, vector<32x512xbf16>
    %cst = arith.constant dense<0.000000e+00> : vector<16x512xf32>
    %5 = tpu.matmul %3, %4, %cst {dimension_numbers = #tpu.dot_dimension_numbers<[1], [0], [0], [1], [0, 0, 1, 1], [], []>} : vector<16x32xbf16>, vector<32x512xbf16>, vector<16x512xf32> -> vector<16x512xf32>
    %c0_2 = arith.constant 0 : index
    %c0_3 = arith.constant 0 : index
    %6 = vector.load %arg3[%c0_2, %c0_3] : memref<1x512xf32, #tpu.memory_space<vmem>>, vector<1x512xf32>
    %7 = vector.broadcast %6 : vector<1x512xf32> to vector<16x512xf32>
    %8 = arith.addf %5, %7 : vector<16x512xf32>
    %cst_4 = arith.constant 0.000000e+00 : f32
    %9 = vector.broadcast %cst_4 : f32 to vector<16x512xf32>
    %10 = arith.maximumf %8, %9 : vector<16x512xf32>
    %11 = arith.truncf %10 : vector<16x512xf32> to vector<16x512xbf16>
    %c0_5 = arith.constant 0 : index
    %c0_6 = arith.constant 0 : index
    %12 = vector.load %arg4[%c0_5, %c0_6] : memref<512x128xbf16, #tpu.memory_space<vmem>>, vector<512x128xbf16>
    %cst_7 = arith.constant dense<0.000000e+00> : vector<16x128xf32>
    %13 = tpu.matmul %11, %12, %cst_7 {dimension_numbers = #tpu.dot_dimension_numbers<[1], [0], [0], [1], [0, 0, 1, 1], [], []>} : vector<16x512xbf16>, vector<512x128xbf16>, vector<16x128xf32> -> vector<16x128xf32>
    %c0_8 = arith.constant 0 : index
    %c0_9 = arith.constant 0 : index
    %14 = vector.load %arg5[%c0_8, %c0_9] : memref<1x128xf32, #tpu.memory_space<vmem>>, vector<1x128xf32>
    %15 = vector.broadcast %14 : vector<1x128xf32> to vector<16x128xf32>
    %16 = arith.addf %13, %15 : vector<16x128xf32>
    %cst_10 = arith.constant 0.000000e+00 : f32
    %17 = vector.broadcast %cst_10 : f32 to vector<16x128xf32>
    %18 = arith.maximumf %16, %17 : vector<16x128xf32>
    %19 = arith.truncf %18 : vector<16x128xf32> to vector<16x128xbf16>
    %c0_11 = arith.constant 0 : index
    %c0_12 = arith.constant 0 : index
    %20 = vector.load %arg6[%c0_11, %c0_12] : memref<128x128xbf16, #tpu.memory_space<vmem>>, vector<128x128xbf16>
    %cst_13 = arith.constant dense<0.000000e+00> : vector<16x128xf32>
    %21 = tpu.matmul %19, %20, %cst_13 {dimension_numbers = #tpu.dot_dimension_numbers<[1], [0], [0], [1], [0, 0, 1, 1], [], []>} : vector<16x128xbf16>, vector<128x128xbf16>, vector<16x128xf32> -> vector<16x128xf32>
    %c0_14 = arith.constant 0 : index
    %c0_15 = arith.constant 0 : index
    %22 = vector.load %arg7[%c0_14, %c0_15] : memref<1x128xf32, #tpu.memory_space<vmem>>, vector<1x128xf32>
    %23 = vector.broadcast %22 : vector<1x128xf32> to vector<16x128xf32>
    %24 = arith.addf %21, %23 : vector<16x128xf32>
    %25 = arith.truncf %24 : vector<16x128xf32> to vector<16x128xbf16>
    %26 = arith.index_cast %1 : i32 to index
    %c0_16 = arith.constant 0 : index
    %27 = vector.load %arg8[%26, %c0_16] : memref<16x128xbf16, #tpu.memory_space<vmem>>, vector<16x128xbf16>
    tpu.vector_store %arg8[%26, %c0_16], %25 {strides = array<i32>} : memref<16x128xbf16, #tpu.memory_space<vmem>>, vector<16x128xbf16>,
    %c1_i32 = arith.constant 1 : i32
    return
  }
  func.func @transform_0(%arg0: i32) -> (i32, i32) {
    %c0_i32 = arith.constant 0 : i32
    %c0_i32_0 = arith.constant 0 : i32
    return %arg0, %c0_i32 : i32, i32
  }
  func.func @transform_1(%arg0: i32) -> (i32, i32) {
    %c0_i32 = arith.constant 0 : i32
    %c0_i32_0 = arith.constant 0 : i32
    %c0_i32_1 = arith.constant 0 : i32
    return %c0_i32, %c0_i32_0 : i32, i32
  }
  func.func @transform_2(%arg0: i32) -> (i32, i32) {
    %c0_i32 = arith.constant 0 : i32
    %c0_i32_0 = arith.constant 0 : i32
    %c0_i32_1 = arith.constant 0 : i32
    return %c0_i32, %c0_i32_0 : i32, i32
  }
  func.func @transform_3(%arg0: i32) -> (i32, i32) {
    %c0_i32 = arith.constant 0 : i32
    %c0_i32_0 = arith.constant 0 : i32
    %c0_i32_1 = arith.constant 0 : i32
    return %c0_i32, %c0_i32_0 : i32, i32
  }
  func.func @transform_4(%arg0: i32) -> (i32, i32) {
    %c0_i32 = arith.constant 0 : i32
    %c0_i32_0 = arith.constant 0 : i32
    %c0_i32_1 = arith.constant 0 : i32
    return %c0_i32, %c0_i32_0 : i32, i32
  }
  func.func @transform_5(%arg0: i32) -> (i32, i32) {
    %c0_i32 = arith.constant 0 : i32
    %c0_i32_0 = arith.constant 0 : i32
    %c0_i32_1 = arith.constant 0 : i32
    return %c0_i32, %c0_i32_0 : i32, i32
  }
  func.func @transform_6(%arg0: i32) -> (i32, i32) {
    %c0_i32 = arith.constant 0 : i32
    %c0_i32_0 = arith.constant 0 : i32
    %c0_i32_1 = arith.constant 0 : i32
    return %c0_i32, %c0_i32_0 : i32, i32
  }
  func.func @transform_7(%arg0: i32) -> (i32, i32) {
    %c0_i32 = arith.constant 0 : i32
    %c0_i32_0 = arith.constant 0 : i32
    return %arg0, %c0_i32 : i32, i32
  }
}

</mosaic_0001>

<llo_original>
// kernel: policy3fc_forward.1
$region0: #{policy3fc_forward.1}
  #allocation0 [shape = 'u32[]', space=smem, size = 0x4, offset = 0x4, fixed_abs, tag = 'smem constant byte address 0x4 - core index']
  #allocation1 [shape = 'u32[144,128]{1,0:T(1,128)}', space=vmem, size = 0x12000, scoped, tag = 'internal scratch']
  %s0 = inlined_call_operand.vmem [shape: bf16[32,32], index: 0, kind: input, shape index: {}]
  %s1 = inlined_call_operand.vmem [shape: bf16[32,512], index: 1, kind: input, shape index: {}]
  %s2 = inlined_call_operand.vmem [shape: f32[1,512], index: 2, kind: input, shape index: {}]
  %s3 = inlined_call_operand.vmem [shape: bf16[512,128], index: 3, kind: input, shape index: {}]
  %s4 = inlined_call_operand.vmem [shape: f32[1,128], index: 4, kind: input, shape index: {}]
  %s5 = inlined_call_operand.vmem [shape: bf16[128,128], index: 5, kind: input, shape index: {}]
  %s6 = inlined_call_operand.vmem [shape: f32[1,128], index: 6, kind: input, shape index: {}]
  %s7 = inlined_call_operand.vmem [shape: bf16[32,128], index: 7, kind: output, shape index: {}]
  %s8 = sld [smem:[#allocation0]]
  $region61: #{policy3fc_forward.1} parent=0
    _
  %s10 = ssub.s32 1, %s8
  %s11 = scalar_select 0, %s10, %s8
  loop: start=0, step=1, limit=4
  $region2: #{policy3fc_forward.1} parent=0 // loop_pre_header
    _
  $region3: #{policy3fc_forward.1} parent=0 // loop_header
    %s13 = sphi 0, %s17
    %p14 = scmp.ge.s32.totalorder %s13, 4
    %s23 = sphi 0, %s25
    %s26 = sphi 0, %s23
    %s27 = sphi 0, %s26
    %s43 = sphi 0, %s27
    %s47 = sphi 0, %s47
    %s49 = sphi 0, %s47
    %s50 = sphi 0, %s49
    %s64 = sphi 0, %s50
    %s68 = sphi 0, %s68
    %s70 = sphi 0, %s68
    %s71 = sphi 0, %s70
    %s85 = sphi 0, %s71
    %s89 = sphi 0, %s89
    %s91 = sphi 0, %s89
    %s92 = sphi 0, %s91
    %s106 = sphi 0, %s92
    %s110 = sphi 0, %s110
    %s112 = sphi 0, %s110
    %s113 = sphi 0, %s112
    %s127 = sphi 0, %s113
    %s131 = sphi 0, %s131
    %s133 = sphi 0, %s131
    %s134 = sphi 0, %s133
    %s148 = sphi 0, %s134
    %s152 = sphi 0, %s152
    %s154 = sphi 0, %s152
    %s155 = sphi 0, %s154
    %s169 = sphi 0, %s155
    %s175 = sphi 0, %s177
    %s178 = sphi 0, %s175
    %s179 = sphi 0, %s178
    %s195 = sphi 0, %s179
  $region4: #{policy3fc_forward.1} parent=0 // loop_header_branch
    %16 = sbr.rel (%p14) target = $region8
  $region5: #{policy3fc_forward.1} parent=0 // loop_body
    %s18 = ssub.s32 %s13, 1
    %s19 = ssub.s32 %s13, 2
    %s20 = sadd.s32 %s13, 1
    %s21 = ssub.s32 %s13, %s20
    %p22 = scmp.eq.s32.totalorder %s21, 0
    %s24 = sadd.s32 %s23, 1
    %s25 = scalar_select %p22, %s23, %s24
    %p28 = pneg %p22
    %p29 = scmp.eq.s32.totalorder %s13, 1
    %p30 = por %p28, %p29
    %p31 = scmp.ne.s32.totalorder %s23, %s26
    %p32 = scmp.eq.s32.totalorder %s13, 0
    %p33 = por %p31, %p32
    %p34 = scmp.ne.s32.totalorder %s23, %s26
    %p35 = scmp.eq.s32.totalorder %s18, 1
    %p36 = por %p34, %p35
    %p37 = scmp.ne.s32.totalorder %s26, %s27
    %p38 = scmp.eq.s32.totalorder %s18, 0
    %p39 = por %p37, %p38
    %p40 = scmp.ne.s32.totalorder %s26, %s27
    %p41 = scmp.eq.s32.totalorder %s19, 1
    %p42 = por %p40, %p41
    %p44 = scmp.ne.s32.totalorder %s27, %s43
    %p45 = scmp.eq.s32.totalorder %s19, 0
    %p46 = por %p44, %p45
    %s48 = sadd.s32 %s47, 1
    %p51 = scmp.eq.s32.totalorder %s13, 1
    %p52 = scmp.ne.s32.totalorder %s47, %s49
    %p53 = scmp.eq.s32.totalorder %s13, 0
    %p54 = por %p52, %p53
    %p55 = scmp.ne.s32.totalorder %s47, %s49
    %p56 = scmp.eq.s32.totalorder %s18, 1
    %p57 = por %p55, %p56
    %p58 = scmp.ne.s32.totalorder %s49, %s50
    %p59 = scmp.eq.s32.totalorder %s18, 0
    %p60 = por %p58, %p59
    %p61 = scmp.ne.s32.totalorder %s49, %s50
    %p62 = scmp.eq.s32.totalorder %s19, 1
    %p63 = por %p61, %p62
    %p65 = scmp.ne.s32.totalorder %s50, %s64
    %p66 = scmp.eq.s32.totalorder %s19, 0
    %p67 = por %p65, %p66
    %s69 = sadd.s32 %s68, 1
    %p72 = scmp.eq.s32.totalorder %s13, 1
    %p73 = scmp.ne.s32.totalorder %s68, %s70
    %p74 = scmp.eq.s32.totalorder %s13, 0
    %p75 = por %p73, %p74
    %p76 = scmp.ne.s32.totalorder %s68, %s70
    %p77 = scmp.eq.s32.totalorder %s18, 1
    %p78 = por %p76, %p77
    %p79 = scmp.ne.s32.totalorder %s70, %s71
    %p80 = scmp.eq.s32.totalorder %s18, 0
    %p81 = por %p79, %p80
    %p82 = scmp.ne.s32.totalorder %s70, %s71
    %p83 = scmp.eq.s32.totalorder %s19, 1
    %p84 = por %p82, %p83
    %p86 = scmp.ne.s32.totalorder %s71, %s85
    %p87 = scmp.eq.s32.totalorder %s19, 0
    %p88 = por %p86, %p87
    %s90 = sadd.s32 %s89, 1
    %p93 = scmp.eq.s32.totalorder %s13, 1
    %p94 = scmp.ne.s32.totalorder %s89, %s91
    %p95 = scmp.eq.s32.totalorder %s13, 0
    %p96 = por %p94, %p95
    %p97 = scmp.ne.s32.totalorder %s89, %s91
    %p98 = scmp.eq.s32.totalorder %s18, 1
    %p99 = por %p97, %p98
    %p100 = scmp.ne.s32.totalorder %s91, %s92
    %p101 = scmp.eq.s32.totalorder %s18, 0
    %p102 = por %p100, %p101
    %p103 = scmp.ne.s32.totalorder %s91, %s92
    %p104 = scmp.eq.s32.totalorder %s19, 1
    %p105 = por %p103, %p104
    %p107 = scmp.ne.s32.totalorder %s92, %s106
    %p108 = scmp.eq.s32.totalorder %s19, 0
    %p109 = por %p107, %p108
    %s111 = sadd.s32 %s110, 1
    %p114 = scmp.eq.s32.totalorder %s13, 1
    %p115 = scmp.ne.s32.totalorder %s110, %s112
    %p116 = scmp.eq.s32.totalorder %s13, 0
    %p117 = por %p115, %p116
    %p118 = scmp.ne.s32.totalorder %s110, %s112
    %p119 = scmp.eq.s32.totalorder %s18, 1
    %p120 = por %p118, %p119
    %p121 = scmp.ne.s32.totalorder %s112, %s113
    %p122 = scmp.eq.s32.totalorder %s18, 0
    %p123 = por %p121, %p122
    %p124 = scmp.ne.s32.totalorder %s112, %s113
    %p125 = scmp.eq.s32.totalorder %s19, 1
    %p126 = por %p124, %p125
    %p128 = scmp.ne.s32.totalorder %s113, %s127
    %p129 = scmp.eq.s32.totalorder %s19, 0
    %p130 = por %p128, %p129
    %s132 = sadd.s32 %s131, 1
    %p135 = scmp.eq.s32.totalorder %s13, 1
    %p136 = scmp.ne.s32.totalorder %s131, %s133
    %p137 = scmp.eq.s32.totalorder %s13, 0
    %p138 = por %p136, %p137
    %p139 = scmp.ne.s32.totalorder %s131, %s133
    %p140 = scmp.eq.s32.totalorder %s18, 1
    %p141 = por %p139, %p140
    %p142 = scmp.ne.s32.totalorder %s133, %s134
    %p143 = scmp.eq.s32.totalorder %s18, 0
    %p144 = por %p142, %p143
    %p145 = scmp.ne.s32.totalorder %s133, %s134
    %p146 = scmp.eq.s32.totalorder %s19, 1
    %p147 = por %p145, %p146
    %p149 = scmp.ne.s32.totalorder %s134, %s148
    %p150 = scmp.eq.s32.totalorder %s19, 0
    %p151 = por %p149, %p150
    %s153 = sadd.s32 %s152, 1
    %p156 = scmp.eq.s32.totalorder %s13, 1
    %p157 = scmp.ne.s32.totalorder %s152, %s154
    %p158 = scmp.eq.s32.totalorder %s13, 0
    %p159 = por %p157, %p158
    %p160 = scmp.ne.s32.totalorder %s152, %s154
    %p161 = scmp.eq.s32.totalorder %s18, 1
    %p162 = por %p160, %p161
    %p163 = scmp.ne.s32.totalorder %s154, %s155
    %p164 = scmp.eq.s32.totalorder %s18, 0
    %p165 = por %p163, %p164
    %p166 = scmp.ne.s32.totalorder %s154, %s155
    %p167 = scmp.eq.s32.totalorder %s19, 1
    %p168 = por %p166, %p167
    %p170 = scmp.ne.s32.totalorder %s155, %s169
    %p171 = scmp.eq.s32.totalorder %s19, 0
    %p172 = por %p170, %p171
    %s173 = ssub.s32 %s13, %s20
    %p174 = scmp.eq.s32.totalorder %s173, 0
    %s176 = sadd.s32 %s175, 1
    %s177 = scalar_select %p174, %s175, %s176
    %p180 = pneg %p174
    %p181 = scmp.eq.s32.totalorder %s13, 1
    %p182 = por %p180, %p181
    %p183 = scmp.ne.s32.totalorder %s175, %s178
    %p184 = scmp.eq.s32.totalorder %s13, 0
    %p185 = por %p183, %p184
    %p186 = scmp.ne.s32.totalorder %s175, %s178
    %p187 = scmp.eq.s32.totalorder %s18, 1
    %p188 = por %p186, %p187
    %p189 = scmp.ne.s32.totalorder %s178, %s179
    %p190 = scmp.eq.s32.totalorder %s18, 0
    %p191 = por %p189, %p190
    %p192 = scmp.ne.s32.totalorder %s178, %s179
    %p193 = scmp.eq.s32.totalorder %s19, 1
    %p194 = por %p192, %p193
    %p196 = scmp.ne.s32.totalorder %s179, %s195
    %p197 = scmp.eq.s32.totalorder %s19, 0
    %p198 = por %p196, %p197
    %p199 = scmp.le.s32.totalorder 1, %s13
    %p200 = scmp.lt.s32.totalorder %s13, 3
    %p201 = pnand %p199, %p200
    %p202 = pneg %p201
    // Predicated region
    $region9: #{policy3fc_forward.1} parent=5 // pred_check
      _
    $region10: #{policy3fc_forward.1} parent=5 // pred_check_branch
      %204 = sbr.rel (%p201) target = $region12
    $region11: #{policy3fc_forward.1} parent=5 // pred_region
      %s205 = ssub.s32 %s13, 1
      // Predicated region
      $region13: #{policy3fc_forward.1} parent=11 // pred_check
        %p206 = pneg %p60
      $region14: #{policy3fc_forward.1} parent=11 // pred_check_branch
        %208 = sbr.rel (%p206) target = $region16
      $region15: #{policy3fc_forward.1} parent=11 // pred_region
        _
      $region16: #{policy3fc_forward.1} parent=11 // pred_fallthru
        _
      // Predicated region
      $region17: #{policy3fc_forward.1} parent=11 // pred_check
        %p209 = pneg %p81
      $region18: #{policy3fc_forward.1} parent=11 // pred_check_branch
        %211 = sbr.rel (%p209) target = $region20
      $region19: #{policy3fc_forward.1} parent=11 // pred_region
        _
      $region20: #{policy3fc_forward.1} parent=11 // pred_fallthru
        _
      // Predicated region
      $region21: #{policy3fc_forward.1} parent=11 // pred_check
        %p212 = pneg %p102
      $region22: #{policy3fc_forward.1} parent=11 // pred_check_branch
        %214 = sbr.rel (%p212) target = $region24
      $region23: #{policy3fc_forward.1} parent=11 // pred_region
        _
      $region24: #{policy3fc_forward.1} parent=11 // pred_fallthru
        _
      // Predicated region
      $region25: #{policy3fc_forward.1} parent=11 // pred_check
        %p215 = pneg %p123
      $region26: #{policy3fc_forward.1} parent=11 // pred_check_branch
        %217 = sbr.rel (%p215) target = $region28
      $region27: #{policy3fc_forward.1} parent=11 // pred_region
        _
      $region28: #{policy3fc_forward.1} parent=11 // pred_fallthru
        _
      // Predicated region
      $region29: #{policy3fc_forward.1} parent=11 // pred_check
        %p218 = pneg %p144
      $region30: #{policy3fc_forward.1} parent=11 // pred_check_branch
        %220 = sbr.rel (%p218) target = $region32
      $region31: #{policy3fc_forward.1} parent=11 // pred_region
        _
      $region32: #{policy3fc_forward.1} parent=11 // pred_fallthru
        _
      // Predicated region
      $region33: #{policy3fc_forward.1} parent=11 // pred_check
        %p221 = pneg %p165
      $region34: #{policy3fc_forward.1} parent=11 // pred_check_branch
        %223 = sbr.rel (%p221) target = $region36
      $region35: #{policy3fc_forward.1} parent=11 // pred_region
        _
      $region36: #{policy3fc_forward.1} parent=11 // pred_fallthru
        _
    $region12: #{policy3fc_forward.1} parent=5 // pred_fallthru
      _
    %p224 = scmp.lt.s32.totalorder %s13, 2
    // Predicated region
    $region37: #{policy3fc_forward.1} parent=5 // pred_check
      %p225 = pneg %p224
    $region38: #{policy3fc_forward.1} parent=5 // pred_check_branch
      %227 = sbr.rel (%p225) target = $region40
    $region39: #{policy3fc_forward.1} parent=5 // pred_region
      // Predicated region
      $region41: #{policy3fc_forward.1} parent=39 // pred_check
        %p228 = pneg %p33
      $region42: #{policy3fc_forward.1} parent=39 // pred_check_branch
        %230 = sbr.rel (%p228) target = $region44
      $region43: #{policy3fc_forward.1} parent=39 // pred_region
        %s231 = smul.u32 2, %s13
        %p232 = scmp.lt.s32.totalorder %s231, 3
        %s233 = scalar_select %p232, %s231, 3
        %s234 = smul.addr %s233, 4
        %s235 = scalar_lea.vmem %s0, %s234
        %s236 = smul.u32 2, %s13
      $region44: #{policy3fc_forward.1} parent=39 // pred_fallthru
        _
    $region40: #{policy3fc_forward.1} parent=5 // pred_fallthru
      _
    %p237 = scmp.le.s32.totalorder 1, %s13
    %p238 = scmp.lt.s32.totalorder %s13, 3
    %p239 = pnand %p237, %p238
    %p240 = pneg %p239
    // Predicated region
    $region45: #{policy3fc_forward.1} parent=5 // pred_check
      _
    $region46: #{policy3fc_forward.1} parent=5 // pred_check_branch
      %242 = sbr.rel (%p239) target = $region48
    $region47: #{policy3fc_forward.1} parent=5 // pred_region
      %s243 = ssub.s32 %s13, 1
      %s244 = smul.u32 2, %s18
      %p245 = scmp.lt.s32.totalorder %s244, 3
      %s246 = scalar_select %p245, %s244, 3
      %s247 = smul.addr %s246, 4
      %s248 = scalar_lea.vmem %s0, %s247
      %p249 = pneg %p39
      %p250 = pneg %p36
      %p251 = pneg %p60
      %p252 = pneg %p57
      %p253 = pneg %p81
      %p254 = pneg %p78
      %p255 = pneg %p102
      %p256 = pneg %p99
      %p257 = pneg %p123
      %p258 = pneg %p120
      %p259 = pneg %p144
      %p260 = pneg %p141
      %p261 = pneg %p165
      %p262 = pneg %p162
      %p263 = pneg %p191
      %p264 = pneg %p188
      %s265 = smul.u32 2, %s18
      %p266 = scmp.lt.s32.totalorder %s265, 3
      %s267 = scalar_select %p266, %s265, 3
      %s268 = smul.addr %s267, 4
      %s269 = scalar_lea.vmem %s7, %s268
      %s270 = smul.u32 2, %s18
      %p271 = scmp.lt.s32.totalorder %s270, 3
      %s272 = scalar_select %p271, %s270, 3
      %s273 = smul.addr %s272, 4
      %s274 = scalar_lea.vmem %s0, %s273
      %s275 = smul.u32 2, %s18
      %s276 = smul.u32 2, %s18
      %p277 = scmp.lt.s32.totalorder %s276, 3
      %s278 = scalar_select %p277, %s276, 3
      %s279 = smul.addr %s278, 4
      %s280 = scalar_lea.vmem %s7, %s279
      %s281 = smul.u32 2, %s18
      %v283 = vld [vmem:[%s274] sm:$0xf]
      %v284 = vld [vmem:[%s274 + $0x4] sm:$0xf]
      %v285 = vld [vmem:[%s1] sm:$0xff]
      %v286 = vld [vmem:[%s1 + $0x8] sm:$0xff]
      %v287 = vld [vmem:[%s1 + $0x10] sm:$0xff]
      %v288 = vld [vmem:[%s1 + $0x18] sm:$0xff]
      %v289 = vld [vmem:[%s1 + $0x20] sm:$0xff]
      %v290 = vld [vmem:[%s1 + $0x28] sm:$0xff]
      %v291 = vld [vmem:[%s1 + $0x30] sm:$0xff]
      %v292 = vld [vmem:[%s1 + $0x38] sm:$0xff]
      %v293 = vld [vmem:[%s2] sm:$0xf]
      %v295 = vlaneseq
      %v296 = vshrl.u32 %v295, 7
      %v297 = vsub.s32 0, %v296
      %v298 = vrot.slane %v293, %v297
      %v299 = vlaneseq
      %v300 = vshrl.u32 %v299, 7
      %v301 = vsub.s32 1, %v300
      %v302 = vrot.slane %v293, %v301
      %v303 = vlaneseq
      %v304 = vshrl.u32 %v303, 7
      %v305 = vsub.s32 2, %v304
      %v306 = vrot.slane %v293, %v305
      %v307 = vlaneseq
      %v308 = vshrl.u32 %v307, 7
      %v309 = vsub.s32 3, %v308
      %v310 = vrot.slane %v293, %v309
      %v317 = vunpack.c.l.b16 %v283
      %v318 = vunpack.c.l.b16 %v284
      %v319 = vpack.c.b16 %v318, %v317
      %v328 = vunpack.c.l.b16 %v285
      %v329 = vunpack.c.h.b16 %v285
      %v330 = vunpack.c.l.b16 %v286
      %v331 = vunpack.c.h.b16 %v286
      %v332 = vunpack.c.l.b16 %v287
      %v333 = vunpack.c.h.b16 %v287
      %v334 = vunpack.c.l.b16 %v288
      %v335 = vunpack.c.h.b16 %v288
      %v336 = vunpack.c.l.b16 %v289
      %v337 = vunpack.c.h.b16 %v289
      %v338 = vunpack.c.l.b16 %v290
      %v339 = vunpack.c.h.b16 %v290
      %v340 = vunpack.c.l.b16 %v291
      %v341 = vunpack.c.h.b16 %v291
      %v342 = vunpack.c.l.b16 %v292
      %v343 = vunpack.c.h.b16 %v292
      %v344 = vpack.c.b16 %v332, %v328
      %v345 = vpack.c.b16 %v333, %v329
      %v346 = vpack.c.b16 %v334, %v330
      %v347 = vpack.c.b16 %v335, %v331
      %v348 = vpack.c.b16 %v340, %v336
      %v349 = vpack.c.b16 %v341, %v337
      %v350 = vpack.c.b16 %v342, %v338
      %v351 = vpack.c.b16 %v343, %v339
      %vm360 = vcmask 261120
      %v362 = vsel %vm360, %v319, 0
      %364 = vmatprep.subr.bf16.mxu0 %v345
      %365 = vmatpush1.bf16.msra.mxu0 %v344
      %366 = vmatprep.subr.bf16.mxu0 %v349
      %367 = vmatpush1.bf16.msra.mxu0 %v348
      %368 = vmatprep.subr.bf16.mxu0 0
      %369 = vmatpush1.bf16.msra.mxu0 0
      %370 = vmatprep.subr.bf16.mxu0 0
      %371 = vmatpush1.bf16.msra.mxu0 0
      %372 = vmatprep.subr.bf16.mxu0 0
      %373 = vmatpush1.bf16.msra.mxu0 0
      %374 = vmatprep.subr.bf16.mxu0 0
      %375 = vmatpush1.bf16.msra.mxu0 0
      %376 = vmatprep.subr.bf16.mxu0 0
      %377 = vmatpush1.bf16.msra.mxu0 0
      %378 = vmatprep.subr.bf16.mxu0 0
      %379 = vmatpush1.bf16.msra.mxu0 0
      %380 = vmatprep.subr.bf16.mxu0 0
      %381 = vmatpush1.bf16.msra.mxu0 0
      %382 = vmatprep.subr.bf16.mxu0 0
      %383 = vmatpush1.bf16.msra.mxu0 0
      %384 = vmatprep.subr.bf16.mxu0 0
      %385 = vmatpush1.bf16.msra.mxu0 0
      %386 = vmatprep.subr.bf16.mxu0 0
      %387 = vmatpush1.bf16.msra.mxu0 0
      %388 = vmatprep.subr.bf16.mxu0 0
      %389 = vmatpush1.bf16.msra.mxu0 0
      %390 = vmatprep.subr.bf16.mxu0 0
      %391 = vmatpush1.bf16.msra.mxu0 0
      %392 = vmatprep.subr.bf16.mxu0 0
      %393 = vmatpush1.bf16.msra.mxu0 0
      %394 = vmatprep.subr.bf16.mxu0 0
      %395 = vmatpush1.bf16.msra.mxu0 0
      %396 = vmatprep.mubr.bf16.mxu0 0
      %397 = vmatmul.mubr.bf16.gmra.mrb[0].mxu0 %v362
      %v398 = vpop.f32.mrb[0].mxu0
      %v399 = vadd.f32 %v298, %v398
      %v400 = vpop.f32.mrb[0].mxu0
      %v401 = vadd.f32 %v302, %v400
      %v402 = vpop.f32.mrb[0].mxu0
      %v403 = vadd.f32 %v298, %v402
      %v404 = vpop.f32.mrb[0].mxu0
      %v405 = vadd.f32 %v302, %v404
      %406 = vdwg.mxu0
      %407 = vmatprep.subr.bf16.mxu0 %v347
      %408 = vmatpush1.bf16.msra.mxu0 %v346
      %409 = vmatprep.subr.bf16.mxu0 %v351
      %410 = vmatpush1.bf16.msra.mxu0 %v350
      %411 = vmatprep.subr.bf16.mxu0 0
      %412 = vmatpush1.bf16.msra.mxu0 0
      %413 = vmatprep.subr.bf16.mxu0 0
      %414 = vmatpush1.bf16.msra.mxu0 0
      %415 = vmatprep.subr.bf16.mxu0 0
      %416 = vmatpush1.bf16.msra.mxu0 0
      %417 = vmatprep.subr.bf16.mxu0 0
      %418 = vmatpush1.bf16.msra.mxu0 0
      %419 = vmatprep.subr.bf16.mxu0 0
      %420 = vmatpush1.bf16.msra.mxu0 0
      %421 = vmatprep.subr.bf16.mxu0 0
      %422 = vmatpush1.bf16.msra.mxu0 0
      %423 = vmatprep.subr.bf16.mxu0 0
      %424 = vmatpush1.bf16.msra.mxu0 0
      %425 = vmatprep.subr.bf16.mxu0 0
      %426 = vmatpush1.bf16.msra.mxu0 0
      %427 = vmatprep.subr.bf16.mxu0 0
      %428 = vmatpush1.bf16.msra.mxu0 0
      %429 = vmatprep.subr.bf16.mxu0 0
      %430 = vmatpush1.bf16.msra.mxu0 0
      %431 = vmatprep.subr.bf16.mxu0 0
      %432 = vmatpush1.bf16.msra.mxu0 0
      %433 = vmatprep.subr.bf16.mxu0 0
      %434 = vmatpush1.bf16.msra.mxu0 0
      %435 = vmatprep.subr.bf16.mxu0 0
      %436 = vmatpush1.bf16.msra.mxu0 0
      %437 = vmatprep.subr.bf16.mxu0 0
      %438 = vmatpush1.bf16.msra.mxu0 0
      %439 = vmatprep.mubr.bf16.mxu0 0
      %440 = vmatmul.mubr.bf16.gmra.mrb[0].mxu0 %v362
      %v441 = vpop.f32.mrb[0].mxu0
      %v442 = vadd.f32 %v306, %v441
      %v443 = vpop.f32.mrb[0].mxu0
      %v444 = vadd.f32 %v310, %v443
      %v445 = vpop.f32.mrb[0].mxu0
      %v446 = vadd.f32 %v306, %v445
      %v447 = vpop.f32.mrb[0].mxu0
      %v448 = vadd.f32 %v310, %v447
      %449 = vdwg.mxu0
      %v450 = vmax.f32 %v399, 0.0
      %v451 = vmax.f32 %v401, 0.0
      %v452 = vmax.f32 %v442, 0.0
      %v453 = vmax.f32 %v444, 0.0
      %v454 = vmax.f32 %v403, 0.0
      %v455 = vmax.f32 %v405, 0.0
      %v456 = vmax.f32 %v446, 0.0
      %v457 = vmax.f32 %v448, 0.0
      %v458 = vpack.c.bf16 %v454, %v450
      %v459 = vpack.c.bf16 %v455, %v451
      %v460 = vpack.c.bf16 %v456, %v452
      %v461 = vpack.c.bf16 %v457, %v453
      %v462 = vld [vmem:[%s3] sm:$0xf]
      %v463 = vld [vmem:[%s3 + $0x4] sm:$0xf]
      %v464 = vld [vmem:[%s3 + $0x8] sm:$0xf]
      %v465 = vld [vmem:[%s3 + $0xc] sm:$0xf]
      %v466 = vld [vmem:[%s3 + $0x10] sm:$0xf]
      %v467 = vld [vmem:[%s3 + $0x14] sm:$0xf]
      %v468 = vld [vmem:[%s3 + $0x18] sm:$0xf]
      %v469 = vld [vmem:[%s3 + $0x1c] sm:$0xf]
      %v470 = vld [vmem:[%s3 + $0x20] sm:$0xf]
      %v471 = vld [vmem:[%s3 + $0x24] sm:$0xf]
      %v472 = vld [vmem:[%s3 + $0x28] sm:$0xf]
      %v473 = vld [vmem:[%s3 + $0x2c] sm:$0xf]
      %v474 = vld [vmem:[%s3 + $0x30] sm:$0xf]
      %v475 = vld [vmem:[%s3 + $0x34] sm:$0xf]
      %v476 = vld [vmem:[%s3 + $0x38] sm:$0xf]
      %v477 = vld [vmem:[%s3 + $0x3c] sm:$0xf]
      %v478 = vld [vmem:[%s3 + $0x40] sm:$0xf]
      %v479 = vld [vmem:[%s3 + $0x44] sm:$0xf]
      %v480 = vld [vmem:[%s3 + $0x48] sm:$0xf]
      %v481 = vld [vmem:[%s3 + $0x4c] sm:$0xf]
      %v482 = vld [vmem:[%s3 + $0x50] sm:$0xf]
      %v483 = vld [vmem:[%s3 + $0x54] sm:$0xf]
      %v484 = vld [vmem:[%s3 + $0x58] sm:$0xf]
      %v485 = vld [vmem:[%s3 + $0x5c] sm:$0xf]
      %v486 = vld [vmem:[%s3 + $0x60] sm:$0xf]
      %v487 = vld [vmem:[%s3 + $0x64] sm:$0xf]
      %v488 = vld [vmem:[%s3 + $0x68] sm:$0xf]
      %v489 = vld [vmem:[%s3 + $0x6c] sm:$0xf]
      %v490 = vld [vmem:[%s3 + $0x70] sm:$0xf]
      %v491 = vld [vmem:[%s3 + $0x74] sm:$0xf]
      %v492 = vld [vmem:[%s3 + $0x78] sm:$0xf]
      %v493 = vld [vmem:[%s3 + $0x7c] sm:$0xf]
      %v494 = vld [vmem:[%s3 + $0x80] sm:$0xf]
      %v495 = vld [vmem:[%s3 + $0x84] sm:$0xf]
      %v496 = vld [vmem:[%s3 + $0x88] sm:$0xf]
      %v497 = vld [vmem:[%s3 + $0x8c] sm:$0xf]
      %v498 = vld [vmem:[%s3 + $0x90] sm:$0xf]
      %v499 = vld [vmem:[%s3 + $0x94] sm:$0xf]
      %v500 = vld [vmem:[%s3 + $0x98] sm:$0xf]
      %v501 = vld [vmem:[%s3 + $0x9c] sm:$0xf]
      %v502 = vld [vmem:[%s3 + $0xa0] sm:$0xf]
      %v503 = vld [vmem:[%s3 + $0xa4] sm:$0xf]
      %v504 = vld [vmem:[%s3 + $0xa8] sm:$0xf]
      %v505 = vld [vmem:[%s3 + $0xac] sm:$0xf]
      %v506 = vld [vmem:[%s3 + $0xb0] sm:$0xf]
      %v507 = vld [vmem:[%s3 + $0xb4] sm:$0xf]
      %v508 = vld [vmem:[%s3 + $0xb8] sm:$0xf]
      %v509 = vld [vmem:[%s3 + $0xbc] sm:$0xf]
      %v510 = vld [vmem:[%s3 + $0xc0] sm:$0xf]
      %v511 = vld [vmem:[%s3 + $0xc4] sm:$0xf]
      %v512 = vld [vmem:[%s3 + $0xc8] sm:$0xf]
      %v513 = vld [vmem:[%s3 + $0xcc] sm:$0xf]
      %v514 = vld [vmem:[%s3 + $0xd0] sm:$0xf]
      %v515 = vld [vmem:[%s3 + $0xd4] sm:$0xf]
      %v516 = vld [vmem:[%s3 + $0xd8] sm:$0xf]
      %v517 = vld [vmem:[%s3 + $0xdc] sm:$0xf]
      %v518 = vld [vmem:[%s3 + $0xe0] sm:$0xf]
      %v519 = vld [vmem:[%s3 + $0xe4] sm:$0xf]
      %v520 = vld [vmem:[%s3 + $0xe8] sm:$0xf]
      %v521 = vld [vmem:[%s3 + $0xec] sm:$0xf]
      %v522 = vld [vmem:[%s3 + $0xf0] sm:$0xf]
      %v523 = vld [vmem:[%s3 + $0xf4] sm:$0xf]
      %v524 = vld [vmem:[%s3 + $0xf8] sm:$0xf]
      %v525 = vld [vmem:[%s3 + $0xfc] sm:$0xf]
      %v526 = vld [vmem:[%s4] sm:$0x1]
      %v528 = vlaneseq
      %v529 = vshrl.u32 %v528, 7
      %v530 = vsub.s32 0, %v529
      %v531 = vrot.slane %v526, %v530
      %v597 = vunpack.c.l.b16 %v462
      %v598 = vunpack.c.l.b16 %v463
      %v599 = vunpack.c.l.b16 %v464
      %v600 = vunpack.c.l.b16 %v465
      %v601 = vunpack.c.l.b16 %v466
      %v602 = vunpack.c.l.b16 %v467
      %v603 = vunpack.c.l.b16 %v468
      %v604 = vunpack.c.l.b16 %v469
      %v605 = vunpack.c.l.b16 %v470
      %v606 = vunpack.c.l.b16 %v471
      %v607 = vunpack.c.l.b16 %v472
      %v608 = vunpack.c.l.b16 %v473
      %v609 = vunpack.c.l.b16 %v474
      %v610 = vunpack.c.l.b16 %v475
      %v611 = vunpack.c.l.b16 %v476
      %v612 = vunpack.c.l.b16 %v477
      %v613 = vunpack.c.l.b16 %v478
      %v614 = vunpack.c.l.b16 %v479
      %v615 = vunpack.c.l.b16 %v480
      %v616 = vunpack.c.l.b16 %v481
      %v617 = vunpack.c.l.b16 %v482
      %v618 = vunpack.c.l.b16 %v483
      %v619 = vunpack.c.l.b16 %v484
      %v620 = vunpack.c.l.b16 %v485
      %v621 = vunpack.c.l.b16 %v486
      %v622 = vunpack.c.l.b16 %v487
      %v623 = vunpack.c.l.b16 %v488
      %v624 = vunpack.c.l.b16 %v489
      %v625 = vunpack.c.l.b16 %v490
      %v626 = vunpack.c.l.b16 %v491
      %v627 = vunpack.c.l.b16 %v492
      %v628 = vunpack.c.l.b16 %v493
      %v629 = vunpack.c.l.b16 %v494
      %v630 = vunpack.c.l.b16 %v495
      %v631 = vunpack.c.l.b16 %v496
      %v632 = vunpack.c.l.b16 %v497
      %v633 = vunpack.c.l.b16 %v498
      %v634 = vunpack.c.l.b16 %v499
      %v635 = vunpack.c.l.b16 %v500
      %v636 = vunpack.c.l.b16 %v501
      %v637 = vunpack.c.l.b16 %v502
      %v638 = vunpack.c.l.b16 %v503
      %v639 = vunpack.c.l.b16 %v504
      %v640 = vunpack.c.l.b16 %v505
      %v641 = vunpack.c.l.b16 %v506
      %v642 = vunpack.c.l.b16 %v507
      %v643 = vunpack.c.l.b16 %v508
      %v644 = vunpack.c.l.b16 %v509
      %v645 = vunpack.c.l.b16 %v510
      %v646 = vunpack.c.l.b16 %v511
      %v647 = vunpack.c.l.b16 %v512
      %v648 = vunpack.c.l.b16 %v513
      %v649 = vunpack.c.l.b16 %v514
      %v650 = vunpack.c.l.b16 %v515
      %v651 = vunpack.c.l.b16 %v516
      %v652 = vunpack.c.l.b16 %v517
      %v653 = vunpack.c.l.b16 %v518
      %v654 = vunpack.c.l.b16 %v519
      %v655 = vunpack.c.l.b16 %v520
      %v656 = vunpack.c.l.b16 %v521
      %v657 = vunpack.c.l.b16 %v522
      %v658 = vunpack.c.l.b16 %v523
      %v659 = vunpack.c.l.b16 %v524
      %v660 = vunpack.c.l.b16 %v525
      %v661 = vpack.c.b16 %v598, %v597
      %v662 = vpack.c.b16 %v600, %v599
      %v663 = vpack.c.b16 %v602, %v601
      %v664 = vpack.c.b16 %v604, %v603
      %v665 = vpack.c.b16 %v606, %v605
      %v666 = vpack.c.b16 %v608, %v607
      %v667 = vpack.c.b16 %v610, %v609
      %v668 = vpack.c.b16 %v612, %v611
      %v669 = vpack.c.b16 %v614, %v613
      %v670 = vpack.c.b16 %v616, %v615
      %v671 = vpack.c.b16 %v618, %v617
      %v672 = vpack.c.b16 %v620, %v619
      %v673 = vpack.c.b16 %v622, %v621
      %v674 = vpack.c.b16 %v624, %v623
      %v675 = vpack.c.b16 %v626, %v625
      %v676 = vpack.c.b16 %v628, %v627
      %v677 = vpack.c.b16 %v630, %v629
      %v678 = vpack.c.b16 %v632, %v631
      %v679 = vpack.c.b16 %v634, %v633
      %v680 = vpack.c.b16 %v636, %v635
      %v681 = vpack.c.b16 %v638, %v637
      %v682 = vpack.c.b16 %v640, %v639
      %v683 = vpack.c.b16 %v642, %v641
      %v684 = vpack.c.b16 %v644, %v643
      %v685 = vpack.c.b16 %v646, %v645
      %v686 = vpack.c.b16 %v648, %v647
      %v687 = vpack.c.b16 %v650, %v649
      %v688 = vpack.c.b16 %v652, %v651
      %v689 = vpack.c.b16 %v654, %v653
      %v690 = vpack.c.b16 %v656, %v655
      %v691 = vpack.c.b16 %v658, %v657
      %v692 = vpack.c.b16 %v660, %v659
      %725 = vmatprep.subr.bf16.mxu0 0
      %726 = vmatpush1.bf16.msra.mxu0 %v661
      %727 = vmatprep.subr.bf16.mxu0 0
      %728 = vmatpush1.bf16.msra.mxu0 %v662
      %729 = vmatprep.subr.bf16.mxu0 0
      %730 = vmatpush1.bf16.msra.mxu0 %v663
      %731 = vmatprep.subr.bf16.mxu0 0
      %732 = vmatpush1.bf16.msra.mxu0 %v664
      %733 = vmatprep.subr.bf16.mxu0 0
      %734 = vmatpush1.bf16.msra.mxu0 %v665
      %735 = vmatprep.subr.bf16.mxu0 0
      %736 = vmatpush1.bf16.msra.mxu0 %v666
      %737 = vmatprep.subr.bf16.mxu0 0
      %738 = vmatpush1.bf16.msra.mxu0 %v667
      %739 = vmatprep.subr.bf16.mxu0 0
      %740 = vmatpush1.bf16.msra.mxu0 %v668
      %741 = vmatprep.subr.bf16.mxu0 0
      %742 = vmatpush1.bf16.msra.mxu0 %v669
      %743 = vmatprep.subr.bf16.mxu0 0
      %744 = vmatpush1.bf16.msra.mxu0 %v670
      %745 = vmatprep.subr.bf16.mxu0 0
      %746 = vmatpush1.bf16.msra.mxu0 %v671
      %747 = vmatprep.subr.bf16.mxu0 0
      %748 = vmatpush1.bf16.msra.mxu0 %v672
      %749 = vmatprep.subr.bf16.mxu0 0
      %750 = vmatpush1.bf16.msra.mxu0 %v673
      %751 = vmatprep.subr.bf16.mxu0 0
      %752 = vmatpush1.bf16.msra.mxu0 %v674
      %753 = vmatprep.subr.bf16.mxu0 0
      %754 = vmatpush1.bf16.msra.mxu0 %v675
      %755 = vmatprep.subr.bf16.mxu0 0
      %756 = vmatpush1.bf16.msra.mxu0 %v676
      %757 = vmatprep.mubr.bf16.mxu0 %v459
      %758 = vmatmul.mubr.bf16.gmra.mrb[0].mxu0 %v458
      %v759 = vpop.f32.mrb[0].mxu0
      %v760 = vadd.f32 %v531, %v759
      %v761 = vpop.f32.mrb[0].mxu0
      %v762 = vpop.f32.mrb[0].mxu0
      %v763 = vadd.f32 %v531, %v762
      %v764 = vpop.f32.mrb[0].mxu0
      %765 = vdwg.mxu0
      %766 = vmatprep.subr.bf16.mxu0 0
      %767 = vmatpush1.bf16.msra.mxu0 %v677
      %768 = vmatprep.subr.bf16.mxu0 0
      %769 = vmatpush1.bf16.msra.mxu0 %v678
      %770 = vmatprep.subr.bf16.mxu0 0
      %771 = vmatpush1.bf16.msra.mxu0 %v679
      %772 = vmatprep.subr.bf16.mxu0 0
      %773 = vmatpush1.bf16.msra.mxu0 %v680
      %774 = vmatprep.subr.bf16.mxu0 0
      %775 = vmatpush1.bf16.msra.mxu0 %v681
      %776 = vmatprep.subr.bf16.mxu0 0
      %777 = vmatpush1.bf16.msra.mxu0 %v682
      %778 = vmatprep.subr.bf16.mxu0 0
      %779 = vmatpush1.bf16.msra.mxu0 %v683
      %780 = vmatprep.subr.bf16.mxu0 0
      %781 = vmatpush1.bf16.msra.mxu0 %v684
      %782 = vmatprep.subr.bf16.mxu0 0
      %783 = vmatpush1.bf16.msra.mxu0 %v685
      %784 = vmatprep.subr.bf16.mxu0 0
      %785 = vmatpush1.bf16.msra.mxu0 %v686
      %786 = vmatprep.subr.bf16.mxu0 0
      %787 = vmatpush1.bf16.msra.mxu0 %v687
      %788 = vmatprep.subr.bf16.mxu0 0
      %789 = vmatpush1.bf16.msra.mxu0 %v688
      %790 = vmatprep.subr.bf16.mxu0 0
      %791 = vmatpush1.bf16.msra.mxu0 %v689
      %792 = vmatprep.subr.bf16.mxu0 0
      %793 = vmatpush1.bf16.msra.mxu0 %v690
      %794 = vmatprep.subr.bf16.mxu0 0
      %795 = vmatpush1.bf16.msra.mxu0 %v691
      %796 = vmatprep.subr.bf16.mxu0 0
      %797 = vmatpush1.bf16.msra.mxu0 %v692
      %798 = vmatprep.mubr.bf16.mxu0 %v461
      %799 = vmatmul.mubr.bf16.gmra.mrb[0].mxu0 %v460
      %v800 = vpop.f32.mrb[0].mxu0
      %v801 = vadd.f32 %v760, %v800
      %v802 = vpop.f32.mrb[0].mxu0
      %v803 = vpop.f32.mrb[0].mxu0
      %v804 = vadd.f32 %v763, %v803
      %v805 = vpop.f32.mrb[0].mxu0
      %806 = vdwg.mxu0
      %v807 = vmax.f32 %v801, 0.0
      %v808 = vmax.f32 %v804, 0.0
      %v809 = vpack.c.bf16 %v808, %v807
      %v810 = vld [vmem:[%s5] sm:$0xf]
      %v811 = vld [vmem:[%s5 + $0x4] sm:$0xf]
      %v812 = vld [vmem:[%s5 + $0x8] sm:$0xf]
      %v813 = vld [vmem:[%s5 + $0xc] sm:$0xf]
      %v814 = vld [vmem:[%s5 + $0x10] sm:$0xf]
      %v815 = vld [vmem:[%s5 + $0x14] sm:$0xf]
      %v816 = vld [vmem:[%s5 + $0x18] sm:$0xf]
      %v817 = vld [vmem:[%s5 + $0x1c] sm:$0xf]
      %v818 = vld [vmem:[%s5 + $0x20] sm:$0xf]
      %v819 = vld [vmem:[%s5 + $0x24] sm:$0xf]
      %v820 = vld [vmem:[%s5 + $0x28] sm:$0xf]
      %v821 = vld [vmem:[%s5 + $0x2c] sm:$0xf]
      %v822 = vld [vmem:[%s5 + $0x30] sm:$0xf]
      %v823 = vld [vmem:[%s5 + $0x34] sm:$0xf]
      %v824 = vld [vmem:[%s5 + $0x38] sm:$0xf]
      %v825 = vld [vmem:[%s5 + $0x3c] sm:$0xf]
      %v826 = vld [vmem:[%s6] sm:$0x1]
      %v828 = vlaneseq
      %v829 = vshrl.u32 %v828, 7
      %v830 = vsub.s32 0, %v829
      %v831 = vrot.slane %v826, %v830
      %v849 = vunpack.c.l.b16 %v810
      %v850 = vunpack.c.l.b16 %v811
      %v851 = vunpack.c.l.b16 %v812
      %v852 = vunpack.c.l.b16 %v813
      %v853 = vunpack.c.l.b16 %v814
      %v854 = vunpack.c.l.b16 %v815
      %v855 = vunpack.c.l.b16 %v816
      %v856 = vunpack.c.l.b16 %v817
      %v857 = vunpack.c.l.b16 %v818
      %v858 = vunpack.c.l.b16 %v819
      %v859 = vunpack.c.l.b16 %v820
      %v860 = vunpack.c.l.b16 %v821
      %v861 = vunpack.c.l.b16 %v822
      %v862 = vunpack.c.l.b16 %v823
      %v863 = vunpack.c.l.b16 %v824
      %v864 = vunpack.c.l.b16 %v825
      %v865 = vpack.c.b16 %v850, %v849
      %v866 = vpack.c.b16 %v852, %v851
      %v867 = vpack.c.b16 %v854, %v853
      %v868 = vpack.c.b16 %v856, %v855
      %v869 = vpack.c.b16 %v858, %v857
      %v870 = vpack.c.b16 %v860, %v859
      %v871 = vpack.c.b16 %v862, %v861
      %v872 = vpack.c.b16 %v864, %v863
      %881 = vmatprep.subr.bf16.mxu0 0
      %882 = vmatpush1.bf16.msra.mxu0 %v865
      %883 = vmatprep.subr.bf16.mxu0 0
      %884 = vmatpush1.bf16.msra.mxu0 %v866
      %885 = vmatprep.subr.bf16.mxu0 0
      %886 = vmatpush1.bf16.msra.mxu0 %v867
      %887 = vmatprep.subr.bf16.mxu0 0
      %888 = vmatpush1.bf16.msra.mxu0 %v868
      %889 = vmatprep.subr.bf16.mxu0 0
      %890 = vmatpush1.bf16.msra.mxu0 %v869
      %891 = vmatprep.subr.bf16.mxu0 0
      %892 = vmatpush1.bf16.msra.mxu0 %v870
      %893 = vmatprep.subr.bf16.mxu0 0
      %894 = vmatpush1.bf16.msra.mxu0 %v871
      %895 = vmatprep.subr.bf16.mxu0 0
      %896 = vmatpush1.bf16.msra.mxu0 %v872
      %897 = vmatprep.subr.bf16.mxu0 0
      %898 = vmatpush1.bf16.msra.mxu0 0
      %899 = vmatprep.subr.bf16.mxu0 0
      %900 = vmatpush1.bf16.msra.mxu0 0
      %901 = vmatprep.subr.bf16.mxu0 0
      %902 = vmatpush1.bf16.msra.mxu0 0
      %903 = vmatprep.subr.bf16.mxu0 0
      %904 = vmatpush1.bf16.msra.mxu0 0
      %905 = vmatprep.subr.bf16.mxu0 0
      %906 = vmatpush1.bf16.msra.mxu0 0
      %907 = vmatprep.subr.bf16.mxu0 0
      %908 = vmatpush1.bf16.msra.mxu0 0
      %909 = vmatprep.subr.bf16.mxu0 0
      %910 = vmatpush1.bf16.msra.mxu0 0
      %911 = vmatprep.subr.bf16.mxu0 0
      %912 = vmatpush1.bf16.msra.mxu0 0
      %913 = vmatprep.mubr.bf16.mxu0 0
      %914 = vmatmul.mubr.bf16.gmra.mrb[0].mxu0 %v809
      %v915 = vpop.f32.mrb[0].mxu0
      %v916 = vadd.f32 %v831, %v915
      %v917 = vpop.f32.mrb[0].mxu0
      %v918 = vpop.f32.mrb[0].mxu0
      %v919 = vadd.f32 %v831, %v918
      %v920 = vpop.f32.mrb[0].mxu0
      %921 = vdwg.mxu0
      %v922 = vpack.c.bf16 %v919, %v916
      %v924 = vunpack.c.l.b16 %v922
      %v925 = vunpack.c.h.b16 %v922
      %v926 = vpack.c.b16 %v924, %v924
      %v927 = vpack.c.b16 %v925, %v925
      %930 = vst [vmem:[%s280] sm:$0xf] %v926
      %931 = vst [vmem:[%s280 + $0x4] sm:$0xf] %v927
      %s932 = smul.u32 2, %s18
      %p933 = scmp.lt.s32.totalorder %s932, 3
      %s934 = scalar_select %p933, %s932, 3
      %s935 = smul.addr %s934, 4
      %s936 = scalar_lea.vmem %s7, %s935
      // Predicated region
      $region49: #{policy3fc_forward.1} parent=47 // pred_check
        %p937 = pneg %p188
      $region50: #{policy3fc_forward.1} parent=47 // pred_check_branch
        %939 = sbr.rel (%p937) target = $region52
      $region51: #{policy3fc_forward.1} parent=47 // pred_region
        %s940 = smul.u32 2, %s18
      $region52: #{policy3fc_forward.1} parent=47 // pred_fallthru
        _
    $region48: #{policy3fc_forward.1} parent=5 // pred_fallthru
      _
    %p941 = scmp.le.s32.totalorder 2, %s13
    // Predicated region
    $region53: #{policy3fc_forward.1} parent=5 // pred_check
      %p942 = pneg %p941
    $region54: #{policy3fc_forward.1} parent=5 // pred_check_branch
      %944 = sbr.rel (%p942) target = $region56
    $region55: #{policy3fc_forward.1} parent=5 // pred_region
      %s945 = ssub.s32 %s13, 2
      // Predicated region
      $region57: #{policy3fc_forward.1} parent=55 // pred_check
        %p946 = pneg %p194
      $region58: #{policy3fc_forward.1} parent=55 // pred_check_branch
        %948 = sbr.rel (%p946) target = $region60
      $region59: #{policy3fc_forward.1} parent=55 // pred_region
        %s949 = smul.u32 2, %s19
        %p950 = scmp.lt.s32.totalorder %s949, 3
        %s951 = scalar_select %p950, %s949, 3
        %s952 = smul.addr %s951, 4
        %s953 = scalar_lea.vmem %s7, %s952
      $region60: #{policy3fc_forward.1} parent=55 // pred_fallthru
        _
    $region56: #{policy3fc_forward.1} parent=5 // pred_fallthru
      _
  $region6: #{policy3fc_forward.1} parent=0 // loop_footer
    %s17 = sadd.s32 1, %s13
  $region7: #{policy3fc_forward.1} parent=0 // loop_footer_branch
    %12 = sbr.rel target = $region3
  $region8: #{policy3fc_forward.1} parent=0 // loop_exit
    _

</llo_original>
